<compile_context>
chip_gen: v7x
topology: tpu7x:2x2x1
jax: 0.10.0
libtpu: 0.0.40
codegen_flags: <defaults>
</compile_context>

<pallas_src>
import jax
import jax.numpy as jnp
from jax.experimental import pallas as pl
from jax.experimental.pallas import tpu as pltpu


def _masked_huber_kernel(out_ref, lab_ref, mask_ref, num_ref, den_ref):
    # grid = (batch_blocks, n_blocks); axis 1 (N) is the reduction axis and the
    # output blocks are resident across it -> accumulator pattern.
    @pl.when(pl.program_id(1) == 0)
    def _():
        num_ref[...] = jnp.zeros_like(num_ref)
        den_ref[...] = jnp.zeros_like(den_ref)

    o = out_ref[...]          # (TB, TN)
    l = lab_ref[...]
    m = mask_ref[...]

    # SmoothL1Loss(reduction='none')(output * mask, labels * mask), beta = 1.0
    d = o * m - l * m
    ad = jnp.abs(d)
    huber = jnp.where(ad < 1.0, 0.5 * d * d, ad - 0.5)

    num_ref[...] += jnp.sum(huber, axis=-1, keepdims=True)   # per-batch loss sum
    den_ref[...] += jnp.sum(m, axis=-1, keepdims=True)       # per-batch mask sum


def masked_huber_loss(output, labels, mask, *, tb=8, tn_cap=4096):
    output = output.astype(jnp.float32)
    labels = labels.astype(jnp.float32)
    mask = mask.astype(jnp.float32)

    B = int(output.shape[0])
    N = 1
    for s in output.shape[1:]:
        N *= int(s)

    o2 = output.reshape(B, N)
    l2 = labels.reshape(B, N)
    m2 = mask.reshape(B, N)

    # Lane-dense layout: pad flattened spatial axis to a multiple of 128 (and of
    # the N tile); pad batch up to the batch tile. Zero padding contributes zero
    # to both the Huber sum and the mask sum.
    np_ = pl.cdiv(N, 128) * 128
    tn = min(np_, tn_cap)
    np_ = pl.cdiv(np_, tn) * tn
    bp = pl.cdiv(B, tb) * tb
    if np_ != N or bp != B:
        pad = ((0, bp - B), (0, np_ - N))
        o2 = jnp.pad(o2, pad)
        l2 = jnp.pad(l2, pad)
        m2 = jnp.pad(m2, pad)

    grid = (bp // tb, np_ // tn)
    in_spec = pl.BlockSpec((tb, tn), lambda i, j: (i, j))
    out_spec = pl.BlockSpec((tb, 1), lambda i, j: (i, 0))

    num, den = pl.pallas_call(
        _masked_huber_kernel,
        out_shape=(jax.ShapeDtypeStruct((bp, 1), jnp.float32),
                   jax.ShapeDtypeStruct((bp, 1), jnp.float32)),
        grid_spec=pltpu.PrefetchScalarGridSpec(
            num_scalar_prefetch=0,
            grid=grid,
            in_specs=[in_spec, in_spec, in_spec],
            out_specs=[out_spec, out_spec],
        ),
        compiler_params=pltpu.CompilerParams(
            dimension_semantics=("parallel", "arbitrary"),
            vmem_limit_bytes=32 * 1024 * 1024,
        ),
        cost_estimate=pl.CostEstimate(
            flops=10 * bp * np_,
            transcendentals=0,
            bytes_accessed=3 * 4 * bp * np_ + 2 * 4 * bp,
        ),
    )(o2, l2, m2)

    # Tiny per-batch division + batch mean done in the wrapper (keeps the batch
    # grid axis "parallel"). Matches `l.sum/mask.sum` then `.mean()` exactly.
    num = num[:B, 0]
    den = den[:B, 0]
    return jnp.mean(num / den)


def _reference(output, labels, mask):
    o = output.astype(jnp.float32)
    l = labels.astype(jnp.float32)
    m = mask.astype(jnp.float32)
    d = o * m - l * m
    ad = jnp.abs(d)
    huber = jnp.where(ad < 1.0, 0.5 * d * d, ad - 0.5)   # SmoothL1, beta=1
    per_b = jnp.sum(huber, axis=(1, 2)) / jnp.sum(m, axis=(1, 2))
    return jnp.mean(per_b)


if __name__ == "__main__":
    key = jax.random.PRNGKey(0)
    k1, k2, k3 = jax.random.split(key, 3)
    B, H, W = 2, 16, 16

    output = jax.random.normal(k1, (B, H, W), dtype=jnp.float32)
    labels = jax.random.normal(k2, (B, H, W), dtype=jnp.float32)
    mask = (jax.random.uniform(k3, (B, H, W)) > 0.3).astype(jnp.float32)

    loss = masked_huber_loss(output, labels, mask)
    loss = jax.block_until_ready(loss)

    ref = _reference(output, labels, mask)
    assert jnp.allclose(loss, ref, atol=1e-5, rtol=1e-5), (loss, ref)

    print("KERNEL_OK")
</pallas_src>

<mosaic_0001>
module attributes {stable_mosaic.version = 11 : i64} {
  func.func @_masked_huber_kernel(%arg0: i32, %arg1: i32, %arg2: memref<8x256xf32, #tpu.memory_space<vmem>>, %arg3: memref<8x256xf32, #tpu.memory_space<vmem>>, %arg4: memref<8x256xf32, #tpu.memory_space<vmem>>, %arg5: memref<8x1xf32, #tpu.memory_space<vmem>>, %arg6: memref<8x1xf32, #tpu.memory_space<vmem>>) attributes {dimension_semantics = [#tpu.dimension_semantics<parallel>, #tpu.dimension_semantics<arbitrary>], iteration_bounds = array<i64: 1, 1>, scalar_prefetch = 0 : i64, scratch_operands = 0 : i64, tpu.core_type = #tpu.core_type<tc>, window_params = [{transform_indices = @transform_0, window_bounds = array<i64: 8, 256>}, {transform_indices = @transform_1, window_bounds = array<i64: 8, 256>}, {transform_indices = @transform_2, window_bounds = array<i64: 8, 256>}, {transform_indices = @transform_3, window_bounds = array<i64: 8, 1>}, {transform_indices = @transform_4, window_bounds = array<i64: 8, 1>}]} {
    %c0_i32 = arith.constant 0 : i32
    %0 = arith.cmpi eq, %arg1, %c0_i32 : i32
    %1 = arith.extui %0 : i1 to i32
    %c0_i32_0 = arith.constant 0 : i32
    %2 = arith.cmpi ne, %1, %c0_i32_0 : i32
    scf.if %2 {
      %cst_18 = arith.constant 0.000000e+00 : f32
      %28 = vector.broadcast %cst_18 : f32 to vector<8x1xf32>
      %c0_19 = arith.constant 0 : index
      %c0_20 = arith.constant 0 : index
      %29 = vector.load %arg5[%c0_19, %c0_20] : memref<8x1xf32, #tpu.memory_space<vmem>>, vector<8x1xf32>
      tpu.vector_store %arg5[%c0_19, %c0_20], %28 {strides = array<i32>} : memref<8x1xf32, #tpu.memory_space<vmem>>, vector<8x1xf32>,
      %cst_21 = arith.constant 0.000000e+00 : f32
      %30 = vector.broadcast %cst_21 : f32 to vector<8x1xf32>
      %c0_22 = arith.constant 0 : index
      %c0_23 = arith.constant 0 : index
      %31 = vector.load %arg6[%c0_22, %c0_23] : memref<8x1xf32, #tpu.memory_space<vmem>>, vector<8x1xf32>
      tpu.vector_store %arg6[%c0_22, %c0_23], %30 {strides = array<i32>} : memref<8x1xf32, #tpu.memory_space<vmem>>, vector<8x1xf32>,
    } else {
    }
    %c0 = arith.constant 0 : index
    %c0_1 = arith.constant 0 : index
    %3 = vector.load %arg2[%c0, %c0_1] : memref<8x256xf32, #tpu.memory_space<vmem>>, vector<8x256xf32>
    %c0_2 = arith.constant 0 : index
    %c0_3 = arith.constant 0 : index
    %4 = vector.load %arg3[%c0_2, %c0_3] : memref<8x256xf32, #tpu.memory_space<vmem>>, vector<8x256xf32>
    %c0_4 = arith.constant 0 : index
    %c0_5 = arith.constant 0 : index
    %5 = vector.load %arg4[%c0_4, %c0_5] : memref<8x256xf32, #tpu.memory_space<vmem>>, vector<8x256xf32>
    %6 = arith.mulf %3, %5 : vector<8x256xf32>
    %7 = arith.mulf %4, %5 : vector<8x256xf32>
    %8 = arith.subf %6, %7 : vector<8x256xf32>
    %9 = math.absf %8 : vector<8x256xf32>
    %cst = arith.constant 1.000000e+00 : f32
    %10 = vector.broadcast %cst : f32 to vector<8x256xf32>
    %11 = arith.cmpf olt, %9, %10 : vector<8x256xf32>
    %cst_6 = arith.constant 5.000000e-01 : f32
    %12 = vector.broadcast %cst_6 : f32 to vector<8x256xf32>
    %13 = arith.mulf %12, %8 : vector<8x256xf32>
    %14 = arith.mulf %13, %8 : vector<8x256xf32>
    %cst_7 = arith.constant 5.000000e-01 : f32
    %15 = vector.broadcast %cst_7 : f32 to vector<8x256xf32>
    %16 = arith.subf %9, %15 : vector<8x256xf32>
    %17 = arith.select %11, %14, %16 : vector<8x256xi1>, vector<8x256xf32>
    %c0_8 = arith.constant 0 : index
    %c0_9 = arith.constant 0 : index
    %18 = vector.load %arg5[%c0_8, %c0_9] : memref<8x1xf32, #tpu.memory_space<vmem>>, vector<8x1xf32>
    %cst_10 = arith.constant dense<0.000000e+00> : vector<8xf32>
    %19 = vector.multi_reduction <add>, %17, %cst_10 [1] : vector<8x256xf32> to vector<8xf32>
    %20 = vector.shape_cast %19 : vector<8xf32> to vector<8x1xf32>
    %21 = arith.addf %18, %20 : vector<8x1xf32>
    %c0_11 = arith.constant 0 : index
    %c0_12 = arith.constant 0 : index
    %22 = vector.load %arg5[%c0_11, %c0_12] : memref<8x1xf32, #tpu.memory_space<vmem>>, vector<8x1xf32>
    tpu.vector_store %arg5[%c0_11, %c0_12], %21 {strides = array<i32>} : memref<8x1xf32, #tpu.memory_space<vmem>>, vector<8x1xf32>,
    %c0_13 = arith.constant 0 : index
    %c0_14 = arith.constant 0 : index
    %23 = vector.load %arg6[%c0_13, %c0_14] : memref<8x1xf32, #tpu.memory_space<vmem>>, vector<8x1xf32>
    %cst_15 = arith.constant dense<0.000000e+00> : vector<8xf32>
    %24 = vector.multi_reduction <add>, %5, %cst_15 [1] : vector<8x256xf32> to vector<8xf32>
    %25 = vector.shape_cast %24 : vector<8xf32> to vector<8x1xf32>
    %26 = arith.addf %23, %25 : vector<8x1xf32>
    %c0_16 = arith.constant 0 : index
    %c0_17 = arith.constant 0 : index
    %27 = vector.load %arg6[%c0_16, %c0_17] : memref<8x1xf32, #tpu.memory_space<vmem>>, vector<8x1xf32>
    tpu.vector_store %arg6[%c0_16, %c0_17], %26 {strides = array<i32>} : memref<8x1xf32, #tpu.memory_space<vmem>>, vector<8x1xf32>,
    return
  }
  func.func @transform_0(%arg0: i32, %arg1: i32) -> (i32, i32) {
    %c0_i32 = arith.constant 0 : i32
    return %arg0, %arg1 : i32, i32
  }
  func.func @transform_1(%arg0: i32, %arg1: i32) -> (i32, i32) {
    %c0_i32 = arith.constant 0 : i32
    return %arg0, %arg1 : i32, i32
  }
  func.func @transform_2(%arg0: i32, %arg1: i32) -> (i32, i32) {
    %c0_i32 = arith.constant 0 : i32
    return %arg0, %arg1 : i32, i32
  }
  func.func @transform_3(%arg0: i32, %arg1: i32) -> (i32, i32) {
    %c0_i32 = arith.constant 0 : i32
    %c0_i32_0 = arith.constant 0 : i32
    return %arg0, %c0_i32 : i32, i32
  }
  func.func @transform_4(%arg0: i32, %arg1: i32) -> (i32, i32) {
    %c0_i32 = arith.constant 0 : i32
    %c0_i32_0 = arith.constant 0 : i32
    return %arg0, %c0_i32 : i32, i32
  }
}

</mosaic_0001>

<llo_original>
// kernel: tpu_custom_call.1
$region0: #{tpu_custom_call.1}
  #allocation0 [shape = 'u32[]', space=smem, size = 0x4, offset = 0x4, fixed_abs, tag = 'smem constant byte address 0x4 - core index']
  #allocation1 [shape = 'u32[144,128]{1,0:T(1,128)}', space=vmem, size = 0x12000, scoped, tag = 'internal scratch']
  %s0 = inlined_call_operand.hbm [shape: f32[8,256], index: 0, kind: input, shape index: {}]
  %s1 = inlined_call_operand.hbm [shape: f32[8,256], index: 1, kind: input, shape index: {}]
  %s2 = inlined_call_operand.hbm [shape: f32[8,256], index: 2, kind: input, shape index: {}]
  %s3 = inlined_call_operand.vmem [shape: f32[8,1], index: 3, kind: output, shape index: {0}]
  %s4 = inlined_call_operand.vmem [shape: f32[8,1], index: 4, kind: output, shape index: {1}]
  %5 = xla_tuple %s3, %s4
  %s6 = sld [smem:[#allocation0]]
  $region46: #{tpu_custom_call.1} parent=0
    _
  %s8 = ssub.s32 1, %s6
  %s9 = scalar_select 0, %s8, %s6
  $region1: #{tpu_custom_call.1} parent=0
    #allocation2 [shape = 'u8[8192]{0}', space=vmem, size = 0x2000, scoped, tag = 'input window, operand 0, single buffered']
    #allocation3 [shape = 's32[1]{0}', space=sflag, size = 0x4, scoped, tag = 'scoped memory for tpu_custom_call.1']
    #allocation4 [shape = 'u8[8192]{0}', space=vmem, size = 0x2000, scoped, tag = 'input window, operand 1, single buffered']
    #allocation5 [shape = 's32[1]{0}', space=sflag, size = 0x4, scoped, tag = 'scoped memory for tpu_custom_call.1']
    #allocation6 [shape = 'u8[8192]{0}', space=vmem, size = 0x2000, scoped, tag = 'input window, operand 2, single buffered']
    %10 = vsyncpa [#allocation3], 0
    %11 = vsyncpa [#allocation5], 0
    // Predicated region
    $region2: #{tpu_custom_call.1} parent=1 // pred_check
      _
    $region3: #{tpu_custom_call.1} parent=1 // pred_check_branch
      %13 = sbr.rel (0) target = $region5
    $region4: #{tpu_custom_call.1} parent=1 // pred_region
      %s15 = ssub.s32 256, 256
      %16 = vsyncadd [#allocation3], %s15
      %s18 = sshll.u32 [#allocation2], 4
      %s19 = int_to_ptr.vmem [resolvable:$true] %s18
      %21 = dma.hbm_to_vmem [thread:$0]  %s0, 256, %s19, [#allocation3]
    $region5: #{tpu_custom_call.1} parent=1 // pred_fallthru
      _
    // Predicated region
    $region6: #{tpu_custom_call.1} parent=1 // pred_check
      _
    $region7: #{tpu_custom_call.1} parent=1 // pred_check_branch
      %23 = sbr.rel (0) target = $region9
    $region8: #{tpu_custom_call.1} parent=1 // pred_region
      %s25 = ssub.s32 256, 256
      %26 = vsyncadd [#allocation5], %s25
      %s28 = sshll.u32 [#allocation4], 4
      %s29 = int_to_ptr.vmem [resolvable:$true] %s28
      %31 = dma.hbm_to_vmem [thread:$0]  %s1, 256, %s29, [#allocation5]
    $region9: #{tpu_custom_call.1} parent=1 // pred_fallthru
      _
    // Predicated region
    $region10: #{tpu_custom_call.1} parent=1 // pred_check
      _
    $region11: #{tpu_custom_call.1} parent=1 // pred_check_branch
      %33 = sbr.rel (0) target = $region13
    $region12: #{tpu_custom_call.1} parent=1 // pred_region
      %s35 = ssub.s32 256, 256
      %36 = vsyncadd [#allocation5], %s35
      %s38 = sshll.u32 [#allocation6], 4
      %s39 = int_to_ptr.vmem [resolvable:$true] %s38
      %41 = dma.hbm_to_vmem [thread:$0]  %s2, 256, %s39, [#allocation5]
    $region13: #{tpu_custom_call.1} parent=1 // pred_fallthru
      _
    // Predicated region
    $region14: #{tpu_custom_call.1} parent=1 // pred_check
      _
    $region15: #{tpu_custom_call.1} parent=1 // pred_check_branch
      %43 = sbr.rel (0) target = $region17
    $region16: #{tpu_custom_call.1} parent=1 // pred_region
      %44 = dma.done [#allocation3], 256
    $region17: #{tpu_custom_call.1} parent=1 // pred_fallthru
      _
    // Predicated region
    $region18: #{tpu_custom_call.1} parent=1 // pred_check
      _
    $region19: #{tpu_custom_call.1} parent=1 // pred_check_branch
      %46 = sbr.rel (0) target = $region21
    $region20: #{tpu_custom_call.1} parent=1 // pred_region
      %47 = dma.done [#allocation5], 256
    $region21: #{tpu_custom_call.1} parent=1 // pred_fallthru
      _
    // Predicated region
    $region22: #{tpu_custom_call.1} parent=1 // pred_check
      _
    $region23: #{tpu_custom_call.1} parent=1 // pred_check_branch
      %49 = sbr.rel (0) target = $region25
    $region24: #{tpu_custom_call.1} parent=1 // pred_region
      %50 = dma.done [#allocation5], 256
    $region25: #{tpu_custom_call.1} parent=1 // pred_fallthru
      _
    %p51 = scmp.eq.s32.totalorder 0, 0
    // Predicated region
    $region26: #{tpu_custom_call.1} parent=1 // pred_check
      %p52 = pneg %p51
    $region27: #{tpu_custom_call.1} parent=1 // pred_check_branch
      %54 = sbr.rel (%p52) target = $region29
    $region28: #{tpu_custom_call.1} parent=1 // pred_region
      %vm55 = vcmask 7168
      %56 = vst.msk [vmem:[%s3] sm:$0xff] %vm55, 0.0
      %57 = vst.msk [vmem:[%s4] sm:$0xff] %vm55, 0.0
    $region29: #{tpu_custom_call.1} parent=1 // pred_fallthru
      _
    %v58 = vld [vmem:[#allocation2] sm:$0xff]
    %v59 = vld [vmem:[#allocation2 + $0x8] sm:$0xff]
    %v60 = vld [vmem:[#allocation4] sm:$0xff]
    %v61 = vld [vmem:[#allocation4 + $0x8] sm:$0xff]
    %v62 = vld [vmem:[#allocation6] sm:$0xff]
    %v63 = vld [vmem:[#allocation6 + $0x8] sm:$0xff]
    %v64 = vmul.f32 %v58, %v62
    %v65 = vmul.f32 %v59, %v63
    %v66 = vmul.f32 %v60, %v62
    %v67 = vmul.f32 %v61, %v63
    %v68 = vsub.f32 %v64, %v66
    %v69 = vsub.f32 %v65, %v67
    %v70 = vand.u32 2147483647, %v68
    %v71 = vand.u32 2147483647, %v69
    %vm72 = vcmp.lt.f32.partialorder %v70, 1.0
    %vm73 = vcmp.lt.f32.partialorder %v71, 1.0
    %v74 = vmul.f32 %v68, 0.5
    %v75 = vmul.f32 %v69, 0.5
    %v76 = vmul.f32 %v74, %v68
    %v77 = vmul.f32 %v75, %v69
    %v78 = vsub.f32 %v70, 0.5
    %v79 = vsub.f32 %v71, 0.5
    %v80 = vsel %vm72, %v76, %v78
    %v81 = vsel %vm73, %v77, %v79
    %v82 = vld [vmem:[%s3] sm:$0xff]
    %v83 = vadd.f32 %v80, %v81
    %84 = vadd.xlane.f32.xlu0 %v83
    %v85 = vpop.xlane.xlu0 %84
    %v86 = vadd.f32 %v82, %v85
    %vm87 = vcmask 7168
    %88 = vst.msk [vmem:[%s3] sm:$0xff] %vm87, %v86
    %v89 = vld [vmem:[%s4] sm:$0xff]
    %v90 = vadd.f32 %v62, %v63
    %91 = vadd.xlane.f32.xlu0 %v90
    %v92 = vpop.xlane.xlu0 %91
    %v93 = vadd.f32 %v89, %v92
    %94 = vst.msk [vmem:[%s4] sm:$0xff] %vm87, %v93
    // Predicated region
    $region30: #{tpu_custom_call.1} parent=1 // pred_check
      _
    $region31: #{tpu_custom_call.1} parent=1 // pred_check_branch
      %96 = sbr.rel (0) target = $region33
    $region32: #{tpu_custom_call.1} parent=1 // pred_region
      _
    $region33: #{tpu_custom_call.1} parent=1 // pred_fallthru
      _
    // Predicated region
    $region34: #{tpu_custom_call.1} parent=1 // pred_check
      _
    $region35: #{tpu_custom_call.1} parent=1 // pred_check_branch
      %98 = sbr.rel (0) target = $region37
    $region36: #{tpu_custom_call.1} parent=1 // pred_region
      _
    $region37: #{tpu_custom_call.1} parent=1 // pred_fallthru
      _
    // Predicated region
    $region38: #{tpu_custom_call.1} parent=1 // pred_check
      _
    $region39: #{tpu_custom_call.1} parent=1 // pred_check_branch
      %100 = sbr.rel (0) target = $region41
    $region40: #{tpu_custom_call.1} parent=1 // pred_region
      _
    $region41: #{tpu_custom_call.1} parent=1 // pred_fallthru
      _
    // Predicated region
    $region42: #{tpu_custom_call.1} parent=1 // pred_check
      _
    $region43: #{tpu_custom_call.1} parent=1 // pred_check_branch
      %102 = sbr.rel (0) target = $region45
    $region44: #{tpu_custom_call.1} parent=1 // pred_region
      _
    $region45: #{tpu_custom_call.1} parent=1 // pred_fallthru
      _
    %103 = vsyncpa [#allocation3], 1
    %104 = vsyncpa [#allocation5], 1

</llo_original>
